<compile_context>
chip_gen: v6e
topology: v6e:2x2x1
jax: 0.10.0
libtpu: 0.0.40
codegen_flags: <defaults>
</compile_context>

<pallas_src>
import functools

import jax
import jax.numpy as jnp
from jax.experimental import pallas as pl
from jax.experimental.pallas import tpu as pltpu

EPS = 1e-12  # torch.nn.functional.normalize default eps


def _round_up(v, m):
    return ((v + m - 1) // m) * m


def _pad2(a, rows, cols):
    return jnp.pad(a, ((0, rows - a.shape[0]), (0, cols - a.shape[1])))


def _encdec_kernel(x_ref, w1_ref, b1_ref, w2_ref, b2_ref,
                   basis_ref, basis_nt_ref,
                   w3_ref, b3_ref, w4_ref, b4_ref,
                   out_ref, fc_ref, *, n_basis):
    x = x_ref[...]

    # ---- encoder MLP ----
    h = jnp.dot(x, w1_ref[...], preferred_element_type=jnp.float32) + b1_ref[...]
    h = jnp.maximum(h, 0.0)
    enc = jnp.dot(h, w2_ref[...], preferred_element_type=jnp.float32) + b2_ref[...]

    # ---- cosine projection ----
    # Row-normalize the encoding via rsqrt (EUP).  The basis is already
    # row-normalized, inv_temp-scaled and transposed outside the kernel.
    sumsq = jnp.sum(enc * enc, axis=-1, keepdims=True)
    enc_n = enc * jax.lax.rsqrt(jnp.maximum(sumsq, EPS * EPS))

    logits = jnp.dot(enc_n, basis_nt_ref[...],
                     preferred_element_type=jnp.float32)        # [TB, N_pad]

    # Mask padded basis columns so they do not perturb the softmax.
    if n_basis != logits.shape[-1]:
        col = jax.lax.broadcasted_iota(jnp.int32, logits.shape, 1)
        logits = jnp.where(col < n_basis, logits, -1e30)

    # ---- softmax over basis axis ----
    logits = logits - jnp.max(logits, axis=-1, keepdims=True)
    p = jnp.exp(logits)
    p = p * pl.reciprocal(jnp.sum(p, axis=-1, keepdims=True), approx=True)

    # ---- reconstruct code from the (un-normalized) basis ----
    fc = jnp.dot(p, basis_ref[...], preferred_element_type=jnp.float32)

    # ---- decoder MLP ----
    h2 = jnp.dot(fc, w3_ref[...], preferred_element_type=jnp.float32) + b3_ref[...]
    h2 = jnp.maximum(h2, 0.0)
    out = jnp.dot(h2, w4_ref[...], preferred_element_type=jnp.float32) + b4_ref[...]

    out_ref[...] = out.astype(out_ref.dtype)
    fc_ref[...] = fc.astype(fc_ref.dtype)


@jax.jit
def encoder_decoder_basis_forward(params, x, inv_temp):
    x = x.astype(jnp.float32)
    B, D_in = x.shape
    H = params["w1"].shape[1]
    L = params["w2"].shape[1]
    N = params["basis"].shape[0]

    # Lane-dense padding (multiples of 128 on the feature/lane axis).
    D_pad = _round_up(D_in, 128)
    H_pad = _round_up(H, 128)
    L_pad = _round_up(L, 128)
    N_pad = _round_up(N, 128)

    # Batch tile: up to 256 rows per grid step, multiple of 8 sublanes.
    TB = min(256, _round_up(B, 8))
    B_pad = _round_up(B, TB)
    grid = (B_pad // TB,)

    # --- pad operands (zeros are inert everywhere; padded softmax columns
    # are masked inside the kernel) ---
    x_p = _pad2(x, B_pad, D_pad)
    w1 = _pad2(params["w1"].astype(jnp.float32), D_pad, H_pad)
    b1 = _pad2(params["b1"].astype(jnp.float32), 1, H_pad)
    w2 = _pad2(params["w2"].astype(jnp.float32), H_pad, L_pad)
    b2 = _pad2(params["b2"].astype(jnp.float32), 1, L_pad)
    basis = params["basis"].astype(jnp.float32)
    basis_p = _pad2(basis, N_pad, L_pad)
    # Hoisted, input-independent: row-normalized + inv_temp-folded + transposed.
    bs = jnp.sum(basis * basis, axis=1, keepdims=True)
    basis_n = basis * jax.lax.rsqrt(jnp.maximum(bs, EPS * EPS))
    basis_nt_p = _pad2((basis_n * inv_temp).T, L_pad, N_pad)
    w3 = _pad2(params["w3"].astype(jnp.float32), L_pad, H_pad)
    b3 = _pad2(params["b3"].astype(jnp.float32), 1, H_pad)
    w4 = _pad2(params["w4"].astype(jnp.float32), H_pad, D_pad)
    b4 = _pad2(params["b4"].astype(jnp.float32), 1, D_pad)

    # --- VMEM budget: resident weights (double-buffered by pipeline) +
    # double-buffered activation tiles + live intermediates ---
    weight_bytes = 4 * (D_pad * H_pad + H_pad * L_pad + 2 * N_pad * L_pad
                        + L_pad * H_pad + H_pad * D_pad
                        + 2 * H_pad + L_pad + D_pad)
    io_tile_bytes = 4 * TB * (2 * D_pad + L_pad)
    scratch_bytes = 4 * TB * (H_pad + L_pad + N_pad)
    vmem_budget = int(min(max(2 * weight_bytes + 2 * io_tile_bytes
                              + 2 * scratch_bytes,
                              32 * 1024 * 1024),
                          48 * 1024 * 1024))

    flops = 2 * B_pad * (D_pad * H_pad + H_pad * L_pad + L_pad * N_pad
                         + N_pad * L_pad + L_pad * H_pad + H_pad * D_pad)
    transcendentals = B_pad * (N_pad + 2)  # exp + rsqrt + reciprocal per row
    bytes_accessed = int(weight_bytes + 4 * B_pad * (2 * D_pad + L_pad))

    kernel = functools.partial(_encdec_kernel, n_basis=N)

    out_p, fc_p = pl.pallas_call(
        kernel,
        out_shape=(
            jax.ShapeDtypeStruct((B_pad, D_pad), jnp.float32),
            jax.ShapeDtypeStruct((B_pad, L_pad), jnp.float32),
        ),
        grid_spec=pltpu.PrefetchScalarGridSpec(
            num_scalar_prefetch=0,
            grid=grid,
            in_specs=[
                pl.BlockSpec((TB, D_pad), lambda i: (i, 0)),       # x tile
                pl.BlockSpec((D_pad, H_pad), lambda i: (0, 0)),    # w1 (resident)
                pl.BlockSpec((1, H_pad), lambda i: (0, 0)),        # b1
                pl.BlockSpec((H_pad, L_pad), lambda i: (0, 0)),    # w2
                pl.BlockSpec((1, L_pad), lambda i: (0, 0)),        # b2
                pl.BlockSpec((N_pad, L_pad), lambda i: (0, 0)),    # basis
                pl.BlockSpec((L_pad, N_pad), lambda i: (0, 0)),    # basis_n^T*inv_temp
                pl.BlockSpec((L_pad, H_pad), lambda i: (0, 0)),    # w3
                pl.BlockSpec((1, H_pad), lambda i: (0, 0)),        # b3
                pl.BlockSpec((H_pad, D_pad), lambda i: (0, 0)),    # w4
                pl.BlockSpec((1, D_pad), lambda i: (0, 0)),        # b4
            ],
            out_specs=(
                pl.BlockSpec((TB, D_pad), lambda i: (i, 0)),       # output
                pl.BlockSpec((TB, L_pad), lambda i: (i, 0)),       # final_code
            ),
        ),
        compiler_params=pltpu.CompilerParams(
            dimension_semantics=("parallel",),
            vmem_limit_bytes=vmem_budget,
        ),
        cost_estimate=pl.CostEstimate(
            flops=flops,
            transcendentals=transcendentals,
            bytes_accessed=bytes_accessed,
        ),
    )(x_p, w1, b1, w2, b2, basis_p, basis_nt_p, w3, b3, w4, b4)

    return out_p[:B, :D_in], fc_p[:B, :L]


def _reference_forward(params, x, inv_temp):
    # pure-JAX reference mirroring the PyTorch forward (cosine_flag=True,
    # normalize_flag=False), run at highest matmul precision.
    hp = jax.lax.Precision.HIGHEST

    def l2n(v):
        n = jnp.sqrt(jnp.sum(v * v, axis=1, keepdims=True))
        return v / jnp.maximum(n, EPS)

    h = jnp.maximum(jnp.dot(x, params["w1"], precision=hp) + params["b1"], 0.0)
    enc = jnp.dot(h, params["w2"], precision=hp) + params["b2"]
    enc_n = l2n(enc)
    basis_n = l2n(params["basis"])
    proj = jax.nn.softmax(
        jnp.dot(enc_n, basis_n.T, precision=hp) * inv_temp, axis=-1)
    fc = jnp.dot(proj, params["basis"], precision=hp)
    h2 = jnp.maximum(jnp.dot(fc, params["w3"], precision=hp) + params["b3"], 0.0)
    out = jnp.dot(h2, params["w4"], precision=hp) + params["b4"]
    return out, fc


def init_params(key, d_in, hidden, latent, n_basis):
    ks = jax.random.split(key, 9)
    s = lambda fan_in: 1.0 / jnp.sqrt(fan_in)
    return {
        "w1": jax.random.uniform(ks[0], (d_in, hidden), jnp.float32, -s(d_in), s(d_in)),
        "b1": jax.random.uniform(ks[1], (1, hidden), jnp.float32, -s(d_in), s(d_in)),
        "w2": jax.random.uniform(ks[2], (hidden, latent), jnp.float32, -s(hidden), s(hidden)),
        "b2": jax.random.uniform(ks[3], (1, latent), jnp.float32, -s(hidden), s(hidden)),
        "basis": jax.random.normal(ks[4], (n_basis, latent), jnp.float32),
        "w3": jax.random.uniform(ks[5], (latent, hidden), jnp.float32, -s(latent), s(latent)),
        "b3": jax.random.uniform(ks[6], (1, hidden), jnp.float32, -s(latent), s(latent)),
        "w4": jax.random.uniform(ks[7], (hidden, d_in), jnp.float32, -s(hidden), s(hidden)),
        "b4": jax.random.uniform(ks[8], (1, d_in), jnp.float32, -s(hidden), s(hidden)),
    }


if __name__ == "__main__":
    B, D_IN, HIDDEN, LATENT, N_BASIS = 8, 32, 64, 32, 16
    INV_TEMP = 1.0

    key = jax.random.PRNGKey(0)
    pkey, xkey = jax.random.split(key)
    params = init_params(pkey, D_IN, HIDDEN, LATENT, N_BASIS)
    x = jax.random.normal(xkey, (B, D_IN), jnp.float32)

    out, final_code = encoder_decoder_basis_forward(params, x, INV_TEMP)
    jax.block_until_ready((out, final_code))

    ref_out, ref_fc = _reference_forward(params, x, INV_TEMP)
    assert out.shape == (B, D_IN) and final_code.shape == (B, LATENT)
    # approx=True reciprocal in the softmax loosens tolerance slightly.
    assert jnp.allclose(out, ref_out, atol=5e-3, rtol=5e-3), \
        float(jnp.max(jnp.abs(out - ref_out)))
    assert jnp.allclose(final_code, ref_fc, atol=5e-3, rtol=5e-3), \
        float(jnp.max(jnp.abs(final_code - ref_fc)))

    print("KERNEL_OK")
</pallas_src>

<mosaic_0001>
module attributes {stable_mosaic.version = 11 : i64} {
  func.func @_encdec_kernel(%arg0: i32, %arg1: memref<8x128xf32, #tpu.memory_space<vmem>>, %arg2: memref<128x128xf32, #tpu.memory_space<vmem>>, %arg3: memref<1x128xf32, #tpu.memory_space<vmem>>, %arg4: memref<128x128xf32, #tpu.memory_space<vmem>>, %arg5: memref<1x128xf32, #tpu.memory_space<vmem>>, %arg6: memref<128x128xf32, #tpu.memory_space<vmem>>, %arg7: memref<128x128xf32, #tpu.memory_space<vmem>>, %arg8: memref<128x128xf32, #tpu.memory_space<vmem>>, %arg9: memref<1x128xf32, #tpu.memory_space<vmem>>, %arg10: memref<128x128xf32, #tpu.memory_space<vmem>>, %arg11: memref<1x128xf32, #tpu.memory_space<vmem>>, %arg12: memref<8x128xf32, #tpu.memory_space<vmem>>, %arg13: memref<8x128xf32, #tpu.memory_space<vmem>>) attributes {dimension_semantics = [#tpu.dimension_semantics<parallel>], iteration_bounds = array<i64: 1>, scalar_prefetch = 0 : i64, scratch_operands = 0 : i64, tpu.core_type = #tpu.core_type<tc>, window_params = [{transform_indices = @transform_0, window_bounds = array<i64: 8, 128>}, {pipeline_mode = #tpu.pipeline_mode<synchronous>, transform_indices = @transform_1, window_bounds = array<i64: 128, 128>}, {pipeline_mode = #tpu.pipeline_mode<synchronous>, transform_indices = @transform_2, window_bounds = array<i64: 1, 128>}, {pipeline_mode = #tpu.pipeline_mode<synchronous>, transform_indices = @transform_3, window_bounds = array<i64: 128, 128>}, {pipeline_mode = #tpu.pipeline_mode<synchronous>, transform_indices = @transform_4, window_bounds = array<i64: 1, 128>}, {pipeline_mode = #tpu.pipeline_mode<synchronous>, transform_indices = @transform_5, window_bounds = array<i64: 128, 128>}, {pipeline_mode = #tpu.pipeline_mode<synchronous>, transform_indices = @transform_6, window_bounds = array<i64: 128, 128>}, {pipeline_mode = #tpu.pipeline_mode<synchronous>, transform_indices = @transform_7, window_bounds = array<i64: 128, 128>}, {pipeline_mode = #tpu.pipeline_mode<synchronous>, transform_indices = @transform_8, window_bounds = array<i64: 1, 128>}, {pipeline_mode = #tpu.pipeline_mode<synchronous>, transform_indices = @transform_9, window_bounds = array<i64: 128, 128>}, {pipeline_mode = #tpu.pipeline_mode<synchronous>, transform_indices = @transform_10, window_bounds = array<i64: 1, 128>}, {transform_indices = @transform_11, window_bounds = array<i64: 8, 128>}, {transform_indices = @transform_12, window_bounds = array<i64: 8, 128>}]} {
    %c0 = arith.constant 0 : index
    %c0_0 = arith.constant 0 : index
    %0 = vector.load %arg1[%c0, %c0_0] : memref<8x128xf32, #tpu.memory_space<vmem>>, vector<8x128xf32>
    %c0_1 = arith.constant 0 : index
    %c0_2 = arith.constant 0 : index
    %1 = vector.load %arg2[%c0_1, %c0_2] : memref<128x128xf32, #tpu.memory_space<vmem>>, vector<128x128xf32>
    %cst = arith.constant dense<0.000000e+00> : vector<8x128xf32>
    %2 = tpu.matmul %0, %1, %cst {dimension_numbers = #tpu.dot_dimension_numbers<[1], [0], [0], [1], [0, 0, 1, 1], [], []>} : vector<8x128xf32>, vector<128x128xf32>, vector<8x128xf32> -> vector<8x128xf32>
    %c0_3 = arith.constant 0 : index
    %c0_4 = arith.constant 0 : index
    %3 = vector.load %arg3[%c0_3, %c0_4] : memref<1x128xf32, #tpu.memory_space<vmem>>, vector<1x128xf32>
    %4 = vector.broadcast %3 : vector<1x128xf32> to vector<8x128xf32>
    %5 = arith.addf %2, %4 : vector<8x128xf32>
    %cst_5 = arith.constant 0.000000e+00 : f32
    %6 = vector.broadcast %cst_5 : f32 to vector<8x128xf32>
    %7 = arith.maximumf %5, %6 : vector<8x128xf32>
    %c0_6 = arith.constant 0 : index
    %c0_7 = arith.constant 0 : index
    %8 = vector.load %arg4[%c0_6, %c0_7] : memref<128x128xf32, #tpu.memory_space<vmem>>, vector<128x128xf32>
    %cst_8 = arith.constant dense<0.000000e+00> : vector<8x128xf32>
    %9 = tpu.matmul %7, %8, %cst_8 {dimension_numbers = #tpu.dot_dimension_numbers<[1], [0], [0], [1], [0, 0, 1, 1], [], []>} : vector<8x128xf32>, vector<128x128xf32>, vector<8x128xf32> -> vector<8x128xf32>
    %c0_9 = arith.constant 0 : index
    %c0_10 = arith.constant 0 : index
    %10 = vector.load %arg5[%c0_9, %c0_10] : memref<1x128xf32, #tpu.memory_space<vmem>>, vector<1x128xf32>
    %11 = vector.broadcast %10 : vector<1x128xf32> to vector<8x128xf32>
    %12 = arith.addf %9, %11 : vector<8x128xf32>
    %13 = arith.mulf %12, %12 : vector<8x128xf32>
    %cst_11 = arith.constant dense<0.000000e+00> : vector<8xf32>
    %14 = vector.multi_reduction <add>, %13, %cst_11 [1] : vector<8x128xf32> to vector<8xf32>
    %15 = vector.shape_cast %14 : vector<8xf32> to vector<8x1xf32>
    %cst_12 = arith.constant 1.000000e-24 : f32
    %16 = vector.broadcast %cst_12 : f32 to vector<8x1xf32>
    %17 = arith.maximumf %15, %16 : vector<8x1xf32>
    %18 = math.rsqrt %17 : vector<8x1xf32>
    %19 = vector.broadcast %18 : vector<8x1xf32> to vector<8x128xf32>
    %20 = arith.mulf %12, %19 : vector<8x128xf32>
    %c0_13 = arith.constant 0 : index
    %c0_14 = arith.constant 0 : index
    %21 = vector.load %arg7[%c0_13, %c0_14] : memref<128x128xf32, #tpu.memory_space<vmem>>, vector<128x128xf32>
    %cst_15 = arith.constant dense<0.000000e+00> : vector<8x128xf32>
    %22 = tpu.matmul %20, %21, %cst_15 {dimension_numbers = #tpu.dot_dimension_numbers<[1], [0], [0], [1], [0, 0, 1, 1], [], []>} : vector<8x128xf32>, vector<128x128xf32>, vector<8x128xf32> -> vector<8x128xf32>
    %23 = tpu.iota {dimensions = array<i32: 1>} : vector<8x128xi32>
    %c16_i32 = arith.constant 16 : i32
    %24 = vector.broadcast %c16_i32 : i32 to vector<8x128xi32>
    %25 = arith.cmpi slt, %23, %24 : vector<8x128xi32>
    %cst_16 = arith.constant -1.000000e+30 : f32
    %26 = vector.broadcast %cst_16 : f32 to vector<8x128xf32>
    %27 = arith.select %25, %22, %26 : vector<8x128xi1>, vector<8x128xf32>
    %cst_17 = arith.constant dense<0xFF800000> : vector<8xf32>
    %28 = vector.multi_reduction <maximumf>, %27, %cst_17 [1] : vector<8x128xf32> to vector<8xf32>
    %29 = vector.shape_cast %28 : vector<8xf32> to vector<8x1xf32>
    %30 = vector.broadcast %29 : vector<8x1xf32> to vector<8x128xf32>
    %31 = arith.subf %27, %30 : vector<8x128xf32>
    %32 = math.exp %31 : vector<8x128xf32>
    %cst_18 = arith.constant dense<0.000000e+00> : vector<8xf32>
    %33 = vector.multi_reduction <add>, %32, %cst_18 [1] : vector<8x128xf32> to vector<8xf32>
    %34 = vector.shape_cast %33 : vector<8xf32> to vector<8x1xf32>
    %35 = tpu.reciprocal %34 {approx = true} : vector<8x1xf32> -> vector<8x1xf32>
    %36 = vector.broadcast %35 : vector<8x1xf32> to vector<8x128xf32>
    %37 = arith.mulf %32, %36 : vector<8x128xf32>
    %c0_19 = arith.constant 0 : index
    %c0_20 = arith.constant 0 : index
    %38 = vector.load %arg6[%c0_19, %c0_20] : memref<128x128xf32, #tpu.memory_space<vmem>>, vector<128x128xf32>
    %cst_21 = arith.constant dense<0.000000e+00> : vector<8x128xf32>
    %39 = tpu.matmul %37, %38, %cst_21 {dimension_numbers = #tpu.dot_dimension_numbers<[1], [0], [0], [1], [0, 0, 1, 1], [], []>} : vector<8x128xf32>, vector<128x128xf32>, vector<8x128xf32> -> vector<8x128xf32>
    %c0_22 = arith.constant 0 : index
    %c0_23 = arith.constant 0 : index
    %40 = vector.load %arg8[%c0_22, %c0_23] : memref<128x128xf32, #tpu.memory_space<vmem>>, vector<128x128xf32>
    %cst_24 = arith.constant dense<0.000000e+00> : vector<8x128xf32>
    %41 = tpu.matmul %39, %40, %cst_24 {dimension_numbers = #tpu.dot_dimension_numbers<[1], [0], [0], [1], [0, 0, 1, 1], [], []>} : vector<8x128xf32>, vector<128x128xf32>, vector<8x128xf32> -> vector<8x128xf32>
    %c0_25 = arith.constant 0 : index
    %c0_26 = arith.constant 0 : index
    %42 = vector.load %arg9[%c0_25, %c0_26] : memref<1x128xf32, #tpu.memory_space<vmem>>, vector<1x128xf32>
    %43 = vector.broadcast %42 : vector<1x128xf32> to vector<8x128xf32>
    %44 = arith.addf %41, %43 : vector<8x128xf32>
    %cst_27 = arith.constant 0.000000e+00 : f32
    %45 = vector.broadcast %cst_27 : f32 to vector<8x128xf32>
    %46 = arith.maximumf %44, %45 : vector<8x128xf32>
    %c0_28 = arith.constant 0 : index
    %c0_29 = arith.constant 0 : index
    %47 = vector.load %arg10[%c0_28, %c0_29] : memref<128x128xf32, #tpu.memory_space<vmem>>, vector<128x128xf32>
    %cst_30 = arith.constant dense<0.000000e+00> : vector<8x128xf32>
    %48 = tpu.matmul %46, %47, %cst_30 {dimension_numbers = #tpu.dot_dimension_numbers<[1], [0], [0], [1], [0, 0, 1, 1], [], []>} : vector<8x128xf32>, vector<128x128xf32>, vector<8x128xf32> -> vector<8x128xf32>
    %c0_31 = arith.constant 0 : index
    %c0_32 = arith.constant 0 : index
    %49 = vector.load %arg11[%c0_31, %c0_32] : memref<1x128xf32, #tpu.memory_space<vmem>>, vector<1x128xf32>
    %50 = vector.broadcast %49 : vector<1x128xf32> to vector<8x128xf32>
    %51 = arith.addf %48, %50 : vector<8x128xf32>
    %c0_33 = arith.constant 0 : index
    %c0_34 = arith.constant 0 : index
    %52 = vector.load %arg12[%c0_33, %c0_34] : memref<8x128xf32, #tpu.memory_space<vmem>>, vector<8x128xf32>
    tpu.vector_store %arg12[%c0_33, %c0_34], %51 {strides = array<i32>} : memref<8x128xf32, #tpu.memory_space<vmem>>, vector<8x128xf32>,
    %c0_35 = arith.constant 0 : index
    %c0_36 = arith.constant 0 : index
    %53 = vector.load %arg13[%c0_35, %c0_36] : memref<8x128xf32, #tpu.memory_space<vmem>>, vector<8x128xf32>
    tpu.vector_store %arg13[%c0_35, %c0_36], %39 {strides = array<i32>} : memref<8x128xf32, #tpu.memory_space<vmem>>, vector<8x128xf32>,
    return
  }
  func.func @transform_0(%arg0: i32) -> (i32, i32) {
    %c0_i32 = arith.constant 0 : i32
    %c0_i32_0 = arith.constant 0 : i32
    return %arg0, %c0_i32 : i32, i32
  }
  func.func @transform_1(%arg0: i32) -> (i32, i32) {
    %c0_i32 = arith.constant 0 : i32
    %c0_i32_0 = arith.constant 0 : i32
    %c0_i32_1 = arith.constant 0 : i32
    return %c0_i32, %c0_i32_0 : i32, i32
  }
  func.func @transform_2(%arg0: i32) -> (i32, i32) {
    %c0_i32 = arith.constant 0 : i32
    %c0_i32_0 = arith.constant 0 : i32
    %c0_i32_1 = arith.constant 0 : i32
    return %c0_i32, %c0_i32_0 : i32, i32
  }
  func.func @transform_3(%arg0: i32) -> (i32, i32) {
    %c0_i32 = arith.constant 0 : i32
    %c0_i32_0 = arith.constant 0 : i32
    %c0_i32_1 = arith.constant 0 : i32
    return %c0_i32, %c0_i32_0 : i32, i32
  }
  func.func @transform_4(%arg0: i32) -> (i32, i32) {
    %c0_i32 = arith.constant 0 : i32
    %c0_i32_0 = arith.constant 0 : i32
    %c0_i32_1 = arith.constant 0 : i32
    return %c0_i32, %c0_i32_0 : i32, i32
  }
  func.func @transform_5(%arg0: i32) -> (i32, i32) {
    %c0_i32 = arith.constant 0 : i32
    %c0_i32_0 = arith.constant 0 : i32
    %c0_i32_1 = arith.constant 0 : i32
    return %c0_i32, %c0_i32_0 : i32, i32
  }
  func.func @transform_6(%arg0: i32) -> (i32, i32) {
    %c0_i32 = arith.constant 0 : i32
    %c0_i32_0 = arith.constant 0 : i32
    %c0_i32_1 = arith.constant 0 : i32
    return %c0_i32, %c0_i32_0 : i32, i32
  }
  func.func @transform_7(%arg0: i32) -> (i32, i32) {
    %c0_i32 = arith.constant 0 : i32
    %c0_i32_0 = arith.constant 0 : i32
    %c0_i32_1 = arith.constant 0 : i32
    return %c0_i32, %c0_i32_0 : i32, i32
  }
  func.func @transform_8(%arg0: i32) -> (i32, i32) {
    %c0_i32 = arith.constant 0 : i32
    %c0_i32_0 = arith.constant 0 : i32
    %c0_i32_1 = arith.constant 0 : i32
    return %c0_i32, %c0_i32_0 : i32, i32
  }
  func.func @transform_9(%arg0: i32) -> (i32, i32) {
    %c0_i32 = arith.constant 0 : i32
    %c0_i32_0 = arith.constant 0 : i32
    %c0_i32_1 = arith.constant 0 : i32
    return %c0_i32, %c0_i32_0 : i32, i32
  }
  func.func @transform_10(%arg0: i32) -> (i32, i32) {
    %c0_i32 = arith.constant 0 : i32
    %c0_i32_0 = arith.constant 0 : i32
    %c0_i32_1 = arith.constant 0 : i32
    return %c0_i32, %c0_i32_0 : i32, i32
  }
  func.func @transform_11(%arg0: i32) -> (i32, i32) {
    %c0_i32 = arith.constant 0 : i32
    %c0_i32_0 = arith.constant 0 : i32
    return %arg0, %c0_i32 : i32, i32
  }
  func.func @transform_12(%arg0: i32) -> (i32, i32) {
    %c0_i32 = arith.constant 0 : i32
    %c0_i32_0 = arith.constant 0 : i32
    return %arg0, %c0_i32 : i32, i32
  }
}

</mosaic_0001>

<llo_original>
// kernel: encoder_decoder_basis_forward.1
$region0: #{encoder_decoder_basis_forward.1}
  #allocation0 [shape = 'u32[]', space=smem, size = 0x4, offset = 0x4, fixed_abs, tag = 'smem constant byte address 0x4 - core index']
  #allocation1 [shape = 'u32[144,128]{1,0:T(1,128)}', space=vmem, size = 0x12000, scoped, tag = 'internal scratch']
  %s0 = inlined_call_operand.vmem [shape: f32[8,128], index: 0, kind: input, shape index: {}]
  %s1 = inlined_call_operand.vmem [shape: f32[128,128], index: 1, kind: input, shape index: {}]
  %s2 = inlined_call_operand.vmem [shape: f32[1,128], index: 2, kind: input, shape index: {}]
  %s3 = inlined_call_operand.vmem [shape: f32[128,128], index: 3, kind: input, shape index: {}]
  %s4 = inlined_call_operand.vmem [shape: f32[1,128], index: 4, kind: input, shape index: {}]
  %s5 = inlined_call_operand.vmem [shape: f32[128,128], index: 5, kind: input, shape index: {}]
  %s6 = inlined_call_operand.vmem [shape: f32[128,128], index: 6, kind: input, shape index: {}]
  %s7 = inlined_call_operand.vmem [shape: f32[128,128], index: 7, kind: input, shape index: {}]
  %s8 = inlined_call_operand.vmem [shape: f32[1,128], index: 8, kind: input, shape index: {}]
  %s9 = inlined_call_operand.vmem [shape: f32[128,128], index: 9, kind: input, shape index: {}]
  %s10 = inlined_call_operand.vmem [shape: f32[1,128], index: 10, kind: input, shape index: {}]
  %s11 = inlined_call_operand.hbm [shape: f32[8,128], index: 11, kind: output, shape index: {0}]
  %s12 = inlined_call_operand.hbm [shape: f32[8,128], index: 12, kind: output, shape index: {1}]
  %13 = xla_tuple %s11, %s12
  %s14 = sld [smem:[#allocation0]]
  $region62: #{encoder_decoder_basis_forward.1} parent=0
    _
  %s16 = ssub.s32 1, %s14
  %s17 = scalar_select 0, %s16, %s14
  $region1: #{encoder_decoder_basis_forward.1} parent=0
    #allocation2 [shape = 'u8[4096]{0}', space=vmem, size = 0x1000, scoped, tag = 'output window, operand 0, single buffered']
    #allocation3 [shape = 's32[1]{0}', space=sflag, size = 0x4, scoped, tag = 'scoped memory for encoder_decoder_basis_forward.1']
    #allocation4 [shape = 'u8[4096]{0}', space=vmem, size = 0x1000, scoped, tag = 'output window, operand 1, single buffered']
    #allocation5 [shape = 's32[1]{0}', space=sflag, size = 0x4, scoped, tag = 'scoped memory for encoder_decoder_basis_forward.1']
    %18 = vsyncpa [#allocation3], 0
    %19 = vsyncpa [#allocation5], 0
    // Predicated region
    $region2: #{encoder_decoder_basis_forward.1} parent=1 // pred_check
      _
    $region3: #{encoder_decoder_basis_forward.1} parent=1 // pred_check_branch
      %21 = sbr.rel (0) target = $region5
    $region4: #{encoder_decoder_basis_forward.1} parent=1 // pred_region
      _
    $region5: #{encoder_decoder_basis_forward.1} parent=1 // pred_fallthru
      _
    // Predicated region
    $region6: #{encoder_decoder_basis_forward.1} parent=1 // pred_check
      _
    $region7: #{encoder_decoder_basis_forward.1} parent=1 // pred_check_branch
      %23 = sbr.rel (0) target = $region9
    $region8: #{encoder_decoder_basis_forward.1} parent=1 // pred_region
      _
    $region9: #{encoder_decoder_basis_forward.1} parent=1 // pred_fallthru
      _
    // Predicated region
    $region10: #{encoder_decoder_basis_forward.1} parent=1 // pred_check
      _
    $region11: #{encoder_decoder_basis_forward.1} parent=1 // pred_check_branch
      %25 = sbr.rel (0) target = $region13
    $region12: #{encoder_decoder_basis_forward.1} parent=1 // pred_region
      _
    $region13: #{encoder_decoder_basis_forward.1} parent=1 // pred_fallthru
      _
    // Predicated region
    $region14: #{encoder_decoder_basis_forward.1} parent=1 // pred_check
      _
    $region15: #{encoder_decoder_basis_forward.1} parent=1 // pred_check_branch
      %27 = sbr.rel (0) target = $region17
    $region16: #{encoder_decoder_basis_forward.1} parent=1 // pred_region
      _
    $region17: #{encoder_decoder_basis_forward.1} parent=1 // pred_fallthru
      _
    // Predicated region
    $region18: #{encoder_decoder_basis_forward.1} parent=1 // pred_check
      _
    $region19: #{encoder_decoder_basis_forward.1} parent=1 // pred_check_branch
      %29 = sbr.rel (0) target = $region21
    $region20: #{encoder_decoder_basis_forward.1} parent=1 // pred_region
      _
    $region21: #{encoder_decoder_basis_forward.1} parent=1 // pred_fallthru
      _
    // Predicated region
    $region22: #{encoder_decoder_basis_forward.1} parent=1 // pred_check
      _
    $region23: #{encoder_decoder_basis_forward.1} parent=1 // pred_check_branch
      %31 = sbr.rel (0) target = $region25
    $region24: #{encoder_decoder_basis_forward.1} parent=1 // pred_region
      _
    $region25: #{encoder_decoder_basis_forward.1} parent=1 // pred_fallthru
      _
    // Predicated region
    $region26: #{encoder_decoder_basis_forward.1} parent=1 // pred_check
      _
    $region27: #{encoder_decoder_basis_forward.1} parent=1 // pred_check_branch
      %33 = sbr.rel (0) target = $region29
    $region28: #{encoder_decoder_basis_forward.1} parent=1 // pred_region
      _
    $region29: #{encoder_decoder_basis_forward.1} parent=1 // pred_fallthru
      _
    // Predicated region
    $region30: #{encoder_decoder_basis_forward.1} parent=1 // pred_check
      _
    $region31: #{encoder_decoder_basis_forward.1} parent=1 // pred_check_branch
      %35 = sbr.rel (0) target = $region33
    $region32: #{encoder_decoder_basis_forward.1} parent=1 // pred_region
      _
    $region33: #{encoder_decoder_basis_forward.1} parent=1 // pred_fallthru
      _
    // Predicated region
    $region34: #{encoder_decoder_basis_forward.1} parent=1 // pred_check
      _
    $region35: #{encoder_decoder_basis_forward.1} parent=1 // pred_check_branch
      %37 = sbr.rel (0) target = $region37
    $region36: #{encoder_decoder_basis_forward.1} parent=1 // pred_region
      _
    $region37: #{encoder_decoder_basis_forward.1} parent=1 // pred_fallthru
      _
    // Predicated region
    $region38: #{encoder_decoder_basis_forward.1} parent=1 // pred_check
      _
    $region39: #{encoder_decoder_basis_forward.1} parent=1 // pred_check_branch
      %39 = sbr.rel (0) target = $region41
    $region40: #{encoder_decoder_basis_forward.1} parent=1 // pred_region
      _
    $region41: #{encoder_decoder_basis_forward.1} parent=1 // pred_fallthru
      _
    // Predicated region
    $region42: #{encoder_decoder_basis_forward.1} parent=1 // pred_check
      _
    $region43: #{encoder_decoder_basis_forward.1} parent=1 // pred_check_branch
      %41 = sbr.rel (0) target = $region45
    $region44: #{encoder_decoder_basis_forward.1} parent=1 // pred_region
      _
    $region45: #{encoder_decoder_basis_forward.1} parent=1 // pred_fallthru
      _
    %v42 = vld [vmem:[%s0] sm:$0xff]
    %v43 = vld [vmem:[%s1] sm:$0xff]
    %v44 = vld [vmem:[%s1 + $0x8] sm:$0xff]
    %v45 = vld [vmem:[%s1 + $0x10] sm:$0xff]
    %v46 = vld [vmem:[%s1 + $0x18] sm:$0xff]
    %v47 = vld [vmem:[%s1 + $0x20] sm:$0xff]
    %v48 = vld [vmem:[%s1 + $0x28] sm:$0xff]
    %v49 = vld [vmem:[%s1 + $0x30] sm:$0xff]
    %v50 = vld [vmem:[%s1 + $0x38] sm:$0xff]
    %v51 = vld [vmem:[%s1 + $0x40] sm:$0xff]
    %v52 = vld [vmem:[%s1 + $0x48] sm:$0xff]
    %v53 = vld [vmem:[%s1 + $0x50] sm:$0xff]
    %v54 = vld [vmem:[%s1 + $0x58] sm:$0xff]
    %v55 = vld [vmem:[%s1 + $0x60] sm:$0xff]
    %v56 = vld [vmem:[%s1 + $0x68] sm:$0xff]
    %v57 = vld [vmem:[%s1 + $0x70] sm:$0xff]
    %v58 = vld [vmem:[%s1 + $0x78] sm:$0xff]
    %v59 = vld [vmem:[%s2] sm:$0x1]
    %v61 = vlaneseq
    %v62 = vshrl.u32 %v61, 7
    %v63 = vsub.s32 0, %v62
    %v64 = vrot.slane %v59, %v63
    %66 = vmatprep.subr.mxu0 0.0
    %67 = vmatpush1.msra.mxu0 %v58
    %68 = vmatprep.subr.mxu0 0.0
    %69 = vmatpush1.msra.mxu0 %v57
    %70 = vmatprep.subr.mxu0 0.0
    %71 = vmatpush1.msra.mxu0 %v56
    %72 = vmatprep.subr.mxu0 0.0
    %73 = vmatpush1.msra.mxu0 %v55
    %74 = vmatprep.subr.mxu0 0.0
    %75 = vmatpush1.msra.mxu0 %v54
    %76 = vmatprep.subr.mxu0 0.0
    %77 = vmatpush1.msra.mxu0 %v53
    %78 = vmatprep.subr.mxu0 0.0
    %79 = vmatpush1.msra.mxu0 %v52
    %80 = vmatprep.subr.mxu0 0.0
    %81 = vmatpush1.msra.mxu0 %v51
    %82 = vmatprep.subr.mxu0 0.0
    %83 = vmatpush1.msra.mxu0 %v50
    %84 = vmatprep.subr.mxu0 0.0
    %85 = vmatpush1.msra.mxu0 %v49
    %86 = vmatprep.subr.mxu0 0.0
    %87 = vmatpush1.msra.mxu0 %v48
    %88 = vmatprep.subr.mxu0 0.0
    %89 = vmatpush1.msra.mxu0 %v47
    %90 = vmatprep.subr.mxu0 0.0
    %91 = vmatpush1.msra.mxu0 %v46
    %92 = vmatprep.subr.mxu0 0.0
    %93 = vmatpush1.msra.mxu0 %v45
    %94 = vmatprep.subr.mxu0 0.0
    %95 = vmatpush1.msra.mxu0 %v44
    %96 = vmatprep.subr.mxu0 0.0
    %97 = vmatpush1.msra.mxu0 %v43
    %98 = vmatprep.subr.mxu0 0.0
    %99 = vmatpush2.msra.mxu0 0.0
    %100 = vmatprep.subr.mxu0 0.0
    %101 = vmatpush2.msra.mxu0 0.0
    %102 = vmatprep.subr.mxu0 0.0
    %103 = vmatpush2.msra.mxu0 0.0
    %104 = vmatprep.subr.mxu0 0.0
    %105 = vmatpush2.msra.mxu0 0.0
    %106 = vmatprep.subr.mxu0 0.0
    %107 = vmatpush2.msra.mxu0 0.0
    %108 = vmatprep.subr.mxu0 0.0
    %109 = vmatpush2.msra.mxu0 0.0
    %110 = vmatprep.subr.mxu0 0.0
    %111 = vmatpush2.msra.mxu0 0.0
    %112 = vmatprep.subr.mxu0 0.0
    %113 = vmatpush2.msra.mxu0 0.0
    %114 = vmatprep.subr.mxu0 0.0
    %115 = vmatpush2.msra.mxu0 0.0
    %116 = vmatprep.subr.mxu0 0.0
    %117 = vmatpush2.msra.mxu0 0.0
    %118 = vmatprep.subr.mxu0 0.0
    %119 = vmatpush2.msra.mxu0 0.0
    %120 = vmatprep.subr.mxu0 0.0
    %121 = vmatpush2.msra.mxu0 0.0
    %122 = vmatprep.subr.mxu0 0.0
    %123 = vmatpush2.msra.mxu0 0.0
    %124 = vmatprep.subr.mxu0 0.0
    %125 = vmatpush2.msra.mxu0 0.0
    %126 = vmatprep.subr.mxu0 0.0
    %127 = vmatpush2.msra.mxu0 0.0
    %128 = vmatprep.subr.mxu0 0.0
    %129 = vmatpush2.msra.mxu0 0.0
    %130 = vmatprep.mubr.f32.mxu0 0.0
    %131 = vmatmul.mubr.f32.gmra.mxu0 %v42
    %v132 = vpop.f32.mrf.mxu0
    %v133 = vadd.f32 %v64, %v132
    %v134 = vpop.f32.mrf.mxu0
    %135 = vdwg.mxu0
    %v136 = vmax.f32 %v133, 0.0
    %v137 = vld [vmem:[%s3] sm:$0xff]
    %v138 = vld [vmem:[%s3 + $0x8] sm:$0xff]
    %v139 = vld [vmem:[%s3 + $0x10] sm:$0xff]
    %v140 = vld [vmem:[%s3 + $0x18] sm:$0xff]
    %v141 = vld [vmem:[%s3 + $0x20] sm:$0xff]
    %v142 = vld [vmem:[%s3 + $0x28] sm:$0xff]
    %v143 = vld [vmem:[%s3 + $0x30] sm:$0xff]
    %v144 = vld [vmem:[%s3 + $0x38] sm:$0xff]
    %v145 = vld [vmem:[%s3 + $0x40] sm:$0xff]
    %v146 = vld [vmem:[%s3 + $0x48] sm:$0xff]
    %v147 = vld [vmem:[%s3 + $0x50] sm:$0xff]
    %v148 = vld [vmem:[%s3 + $0x58] sm:$0xff]
    %v149 = vld [vmem:[%s3 + $0x60] sm:$0xff]
    %v150 = vld [vmem:[%s3 + $0x68] sm:$0xff]
    %v151 = vld [vmem:[%s3 + $0x70] sm:$0xff]
    %v152 = vld [vmem:[%s3 + $0x78] sm:$0xff]
    %v153 = vld [vmem:[%s4] sm:$0x1]
    %v155 = vlaneseq
    %v156 = vshrl.u32 %v155, 7
    %v157 = vsub.s32 0, %v156
    %v158 = vrot.slane %v153, %v157
    %160 = vmatprep.subr.mxu0 0.0
    %161 = vmatpush1.msra.mxu0 %v152
    %162 = vmatprep.subr.mxu0 0.0
    %163 = vmatpush1.msra.mxu0 %v151
    %164 = vmatprep.subr.mxu0 0.0
    %165 = vmatpush1.msra.mxu0 %v150
    %166 = vmatprep.subr.mxu0 0.0
    %167 = vmatpush1.msra.mxu0 %v149
    %168 = vmatprep.subr.mxu0 0.0
    %169 = vmatpush1.msra.mxu0 %v148
    %170 = vmatprep.subr.mxu0 0.0
    %171 = vmatpush1.msra.mxu0 %v147
    %172 = vmatprep.subr.mxu0 0.0
    %173 = vmatpush1.msra.mxu0 %v146
    %174 = vmatprep.subr.mxu0 0.0
    %175 = vmatpush1.msra.mxu0 %v145
    %176 = vmatprep.subr.mxu0 0.0
    %177 = vmatpush1.msra.mxu0 %v144
    %178 = vmatprep.subr.mxu0 0.0
    %179 = vmatpush1.msra.mxu0 %v143
    %180 = vmatprep.subr.mxu0 0.0
    %181 = vmatpush1.msra.mxu0 %v142
    %182 = vmatprep.subr.mxu0 0.0
    %183 = vmatpush1.msra.mxu0 %v141
    %184 = vmatprep.subr.mxu0 0.0
    %185 = vmatpush1.msra.mxu0 %v140
    %186 = vmatprep.subr.mxu0 0.0
    %187 = vmatpush1.msra.mxu0 %v139
    %188 = vmatprep.subr.mxu0 0.0
    %189 = vmatpush1.msra.mxu0 %v138
    %190 = vmatprep.subr.mxu0 0.0
    %191 = vmatpush1.msra.mxu0 %v137
    %192 = vmatprep.subr.mxu0 0.0
    %193 = vmatpush2.msra.mxu0 0.0
    %194 = vmatprep.subr.mxu0 0.0
    %195 = vmatpush2.msra.mxu0 0.0
    %196 = vmatprep.subr.mxu0 0.0
    %197 = vmatpush2.msra.mxu0 0.0
    %198 = vmatprep.subr.mxu0 0.0
    %199 = vmatpush2.msra.mxu0 0.0
    %200 = vmatprep.subr.mxu0 0.0
    %201 = vmatpush2.msra.mxu0 0.0
    %202 = vmatprep.subr.mxu0 0.0
    %203 = vmatpush2.msra.mxu0 0.0
    %204 = vmatprep.subr.mxu0 0.0
    %205 = vmatpush2.msra.mxu0 0.0
    %206 = vmatprep.subr.mxu0 0.0
    %207 = vmatpush2.msra.mxu0 0.0
    %208 = vmatprep.subr.mxu0 0.0
    %209 = vmatpush2.msra.mxu0 0.0
    %210 = vmatprep.subr.mxu0 0.0
    %211 = vmatpush2.msra.mxu0 0.0
    %212 = vmatprep.subr.mxu0 0.0
    %213 = vmatpush2.msra.mxu0 0.0
    %214 = vmatprep.subr.mxu0 0.0
    %215 = vmatpush2.msra.mxu0 0.0
    %216 = vmatprep.subr.mxu0 0.0
    %217 = vmatpush2.msra.mxu0 0.0
    %218 = vmatprep.subr.mxu0 0.0
    %219 = vmatpush2.msra.mxu0 0.0
    %220 = vmatprep.subr.mxu0 0.0
    %221 = vmatpush2.msra.mxu0 0.0
    %222 = vmatprep.subr.mxu0 0.0
    %223 = vmatpush2.msra.mxu0 0.0
    %224 = vmatprep.mubr.f32.mxu0 0.0
    %225 = vmatmul.mubr.f32.gmra.mxu0 %v136
    %v226 = vpop.f32.mrf.mxu0
    %v227 = vadd.f32 %v158, %v226
    %v228 = vpop.f32.mrf.mxu0
    %229 = vdwg.mxu0
    %v230 = vmul.f32 %v227, %v227
    %231 = vadd.xlane.f32.xlu0 %v230
    %v232 = vpop.xlane.xlu0 %231
    %v233 = vmax.f32 %v232, 1e-24
    %v234 = vrsqrt.pop %v233
    %v235 = vmul.f32 %v227, %v234
    %v236 = vld [vmem:[%s6] sm:$0xff]
    %v237 = vld [vmem:[%s6 + $0x8] sm:$0xff]
    %v238 = vld [vmem:[%s6 + $0x10] sm:$0xff]
    %v239 = vld [vmem:[%s6 + $0x18] sm:$0xff]
    %v240 = vld [vmem:[%s6 + $0x20] sm:$0xff]
    %v241 = vld [vmem:[%s6 + $0x28] sm:$0xff]
    %v242 = vld [vmem:[%s6 + $0x30] sm:$0xff]
    %v243 = vld [vmem:[%s6 + $0x38] sm:$0xff]
    %v244 = vld [vmem:[%s6 + $0x40] sm:$0xff]
    %v245 = vld [vmem:[%s6 + $0x48] sm:$0xff]
    %v246 = vld [vmem:[%s6 + $0x50] sm:$0xff]
    %v247 = vld [vmem:[%s6 + $0x58] sm:$0xff]
    %v248 = vld [vmem:[%s6 + $0x60] sm:$0xff]
    %v249 = vld [vmem:[%s6 + $0x68] sm:$0xff]
    %v250 = vld [vmem:[%s6 + $0x70] sm:$0xff]
    %v251 = vld [vmem:[%s6 + $0x78] sm:$0xff]
    %252 = vmatprep.subr.mxu0 0.0
    %253 = vmatpush1.msra.mxu0 %v251
    %254 = vmatprep.subr.mxu0 0.0
    %255 = vmatpush1.msra.mxu0 %v250
    %256 = vmatprep.subr.mxu0 0.0
    %257 = vmatpush1.msra.mxu0 %v249
    %258 = vmatprep.subr.mxu0 0.0
    %259 = vmatpush1.msra.mxu0 %v248
    %260 = vmatprep.subr.mxu0 0.0
    %261 = vmatpush1.msra.mxu0 %v247
    %262 = vmatprep.subr.mxu0 0.0
    %263 = vmatpush1.msra.mxu0 %v246
    %264 = vmatprep.subr.mxu0 0.0
    %265 = vmatpush1.msra.mxu0 %v245
    %266 = vmatprep.subr.mxu0 0.0
    %267 = vmatpush1.msra.mxu0 %v244
    %268 = vmatprep.subr.mxu0 0.0
    %269 = vmatpush1.msra.mxu0 %v243
    %270 = vmatprep.subr.mxu0 0.0
    %271 = vmatpush1.msra.mxu0 %v242
    %272 = vmatprep.subr.mxu0 0.0
    %273 = vmatpush1.msra.mxu0 %v241
    %274 = vmatprep.subr.mxu0 0.0
    %275 = vmatpush1.msra.mxu0 %v240
    %276 = vmatprep.subr.mxu0 0.0
    %277 = vmatpush1.msra.mxu0 %v239
    %278 = vmatprep.subr.mxu0 0.0
    %279 = vmatpush1.msra.mxu0 %v238
    %280 = vmatprep.subr.mxu0 0.0
    %281 = vmatpush1.msra.mxu0 %v237
    %282 = vmatprep.subr.mxu0 0.0
    %283 = vmatpush1.msra.mxu0 %v236
    %284 = vmatprep.subr.mxu0 0.0
    %285 = vmatpush2.msra.mxu0 0.0
    %286 = vmatprep.subr.mxu0 0.0
    %287 = vmatpush2.msra.mxu0 0.0
    %288 = vmatprep.subr.mxu0 0.0
    %289 = vmatpush2.msra.mxu0 0.0
    %290 = vmatprep.subr.mxu0 0.0
    %291 = vmatpush2.msra.mxu0 0.0
    %292 = vmatprep.subr.mxu0 0.0
    %293 = vmatpush2.msra.mxu0 0.0
    %294 = vmatprep.subr.mxu0 0.0
    %295 = vmatpush2.msra.mxu0 0.0
    %296 = vmatprep.subr.mxu0 0.0
    %297 = vmatpush2.msra.mxu0 0.0
    %298 = vmatprep.subr.mxu0 0.0
    %299 = vmatpush2.msra.mxu0 0.0
    %300 = vmatprep.subr.mxu0 0.0
    %301 = vmatpush2.msra.mxu0 0.0
    %302 = vmatprep.subr.mxu0 0.0
    %303 = vmatpush2.msra.mxu0 0.0
    %304 = vmatprep.subr.mxu0 0.0
    %305 = vmatpush2.msra.mxu0 0.0
    %306 = vmatprep.subr.mxu0 0.0
    %307 = vmatpush2.msra.mxu0 0.0
    %308 = vmatprep.subr.mxu0 0.0
    %309 = vmatpush2.msra.mxu0 0.0
    %310 = vmatprep.subr.mxu0 0.0
    %311 = vmatpush2.msra.mxu0 0.0
    %312 = vmatprep.subr.mxu0 0.0
    %313 = vmatpush2.msra.mxu0 0.0
    %314 = vmatprep.subr.mxu0 0.0
    %315 = vmatpush2.msra.mxu0 0.0
    %316 = vmatprep.mubr.f32.mxu0 0.0
    %317 = vmatmul.mubr.f32.gmra.mxu0 %v235
    %v318 = vpop.f32.mrf.mxu0
    %v319 = vadd.f32 0.0, %v318
    %v320 = vpop.f32.mrf.mxu0
    %321 = vdwg.mxu0
    %v322 = vlaneseq
    %v323 = vand.u32 %v322, 127
    %vm324 = vcmp.lt.s32.totalorder %v323, 16
    %v325 = vsel %vm324, %v319, -1e+30
    %326 = vmax.xlane.f32.xlu0 %v325
    %v327 = vpop.xlane.xlu0 %326
    %v328 = vsub.f32 %v325, %v327
    %v329 = vmul.f32 %v328, 1.442695
    %v330 = vpow.pop %v329
    %331 = vadd.xlane.f32.xlu0 %v330
    %v332 = vpop.xlane.xlu0 %331
    %v333 = vrcp.pop %v332
    %v334 = vmul.f32 %v330, %v333
    %v335 = vld [vmem:[%s5] sm:$0xff]
    %v336 = vld [vmem:[%s5 + $0x8] sm:$0xff]
    %v337 = vld [vmem:[%s5 + $0x10] sm:$0xff]
    %v338 = vld [vmem:[%s5 + $0x18] sm:$0xff]
    %v339 = vld [vmem:[%s5 + $0x20] sm:$0xff]
    %v340 = vld [vmem:[%s5 + $0x28] sm:$0xff]
    %v341 = vld [vmem:[%s5 + $0x30] sm:$0xff]
    %v342 = vld [vmem:[%s5 + $0x38] sm:$0xff]
    %v343 = vld [vmem:[%s5 + $0x40] sm:$0xff]
    %v344 = vld [vmem:[%s5 + $0x48] sm:$0xff]
    %v345 = vld [vmem:[%s5 + $0x50] sm:$0xff]
    %v346 = vld [vmem:[%s5 + $0x58] sm:$0xff]
    %v347 = vld [vmem:[%s5 + $0x60] sm:$0xff]
    %v348 = vld [vmem:[%s5 + $0x68] sm:$0xff]
    %v349 = vld [vmem:[%s5 + $0x70] sm:$0xff]
    %v350 = vld [vmem:[%s5 + $0x78] sm:$0xff]
    %351 = vmatprep.subr.mxu0 0.0
    %352 = vmatpush1.msra.mxu0 %v350
    %353 = vmatprep.subr.mxu0 0.0
    %354 = vmatpush1.msra.mxu0 %v349
    %355 = vmatprep.subr.mxu0 0.0
    %356 = vmatpush1.msra.mxu0 %v348
    %357 = vmatprep.subr.mxu0 0.0
    %358 = vmatpush1.msra.mxu0 %v347
    %359 = vmatprep.subr.mxu0 0.0
    %360 = vmatpush1.msra.mxu0 %v346
    %361 = vmatprep.subr.mxu0 0.0
    %362 = vmatpush1.msra.mxu0 %v345
    %363 = vmatprep.subr.mxu0 0.0
    %364 = vmatpush1.msra.mxu0 %v344
    %365 = vmatprep.subr.mxu0 0.0
    %366 = vmatpush1.msra.mxu0 %v343
    %367 = vmatprep.subr.mxu0 0.0
    %368 = vmatpush1.msra.mxu0 %v342
    %369 = vmatprep.subr.mxu0 0.0
    %370 = vmatpush1.msra.mxu0 %v341
    %371 = vmatprep.subr.mxu0 0.0
    %372 = vmatpush1.msra.mxu0 %v340
    %373 = vmatprep.subr.mxu0 0.0
    %374 = vmatpush1.msra.mxu0 %v339
    %375 = vmatprep.subr.mxu0 0.0
    %376 = vmatpush1.msra.mxu0 %v338
    %377 = vmatprep.subr.mxu0 0.0
    %378 = vmatpush1.msra.mxu0 %v337
    %379 = vmatprep.subr.mxu0 0.0
    %380 = vmatpush1.msra.mxu0 %v336
    %381 = vmatprep.subr.mxu0 0.0
    %382 = vmatpush1.msra.mxu0 %v335
    %383 = vmatprep.subr.mxu0 0.0
    %384 = vmatpush2.msra.mxu0 0.0
    %385 = vmatprep.subr.mxu0 0.0
    %386 = vmatpush2.msra.mxu0 0.0
    %387 = vmatprep.subr.mxu0 0.0
    %388 = vmatpush2.msra.mxu0 0.0
    %389 = vmatprep.subr.mxu0 0.0
    %390 = vmatpush2.msra.mxu0 0.0
    %391 = vmatprep.subr.mxu0 0.0
    %392 = vmatpush2.msra.mxu0 0.0
    %393 = vmatprep.subr.mxu0 0.0
    %394 = vmatpush2.msra.mxu0 0.0
    %395 = vmatprep.subr.mxu0 0.0
    %396 = vmatpush2.msra.mxu0 0.0
    %397 = vmatprep.subr.mxu0 0.0
    %398 = vmatpush2.msra.mxu0 0.0
    %399 = vmatprep.subr.mxu0 0.0
    %400 = vmatpush2.msra.mxu0 0.0
    %401 = vmatprep.subr.mxu0 0.0
    %402 = vmatpush2.msra.mxu0 0.0
    %403 = vmatprep.subr.mxu0 0.0
    %404 = vmatpush2.msra.mxu0 0.0
    %405 = vmatprep.subr.mxu0 0.0
    %406 = vmatpush2.msra.mxu0 0.0
    %407 = vmatprep.subr.mxu0 0.0
    %408 = vmatpush2.msra.mxu0 0.0
    %409 = vmatprep.subr.mxu0 0.0
    %410 = vmatpush2.msra.mxu0 0.0
    %411 = vmatprep.subr.mxu0 0.0
    %412 = vmatpush2.msra.mxu0 0.0
    %413 = vmatprep.subr.mxu0 0.0
    %414 = vmatpush2.msra.mxu0 0.0
    %415 = vmatprep.mubr.f32.mxu0 0.0
    %416 = vmatmul.mubr.f32.gmra.mxu0 %v334
    %v417 = vpop.f32.mrf.mxu0
    %v418 = vadd.f32 0.0, %v417
    %v419 = vpop.f32.mrf.mxu0
    %420 = vdwg.mxu0
    %v421 = vld [vmem:[%s7] sm:$0xff]
    %v422 = vld [vmem:[%s7 + $0x8] sm:$0xff]
    %v423 = vld [vmem:[%s7 + $0x10] sm:$0xff]
    %v424 = vld [vmem:[%s7 + $0x18] sm:$0xff]
    %v425 = vld [vmem:[%s7 + $0x20] sm:$0xff]
    %v426 = vld [vmem:[%s7 + $0x28] sm:$0xff]
    %v427 = vld [vmem:[%s7 + $0x30] sm:$0xff]
    %v428 = vld [vmem:[%s7 + $0x38] sm:$0xff]
    %v429 = vld [vmem:[%s7 + $0x40] sm:$0xff]
    %v430 = vld [vmem:[%s7 + $0x48] sm:$0xff]
    %v431 = vld [vmem:[%s7 + $0x50] sm:$0xff]
    %v432 = vld [vmem:[%s7 + $0x58] sm:$0xff]
    %v433 = vld [vmem:[%s7 + $0x60] sm:$0xff]
    %v434 = vld [vmem:[%s7 + $0x68] sm:$0xff]
    %v435 = vld [vmem:[%s7 + $0x70] sm:$0xff]
    %v436 = vld [vmem:[%s7 + $0x78] sm:$0xff]
    %v437 = vld [vmem:[%s8] sm:$0x1]
    %v439 = vlaneseq
    %v440 = vshrl.u32 %v439, 7
    %v441 = vsub.s32 0, %v440
    %v442 = vrot.slane %v437, %v441
    %444 = vmatprep.subr.mxu0 0.0
    %445 = vmatpush1.msra.mxu0 %v436
    %446 = vmatprep.subr.mxu0 0.0
    %447 = vmatpush1.msra.mxu0 %v435
    %448 = vmatprep.subr.mxu0 0.0
    %449 = vmatpush1.msra.mxu0 %v434
    %450 = vmatprep.subr.mxu0 0.0
    %451 = vmatpush1.msra.mxu0 %v433
    %452 = vmatprep.subr.mxu0 0.0
    %453 = vmatpush1.msra.mxu0 %v432
    %454 = vmatprep.subr.mxu0 0.0
    %455 = vmatpush1.msra.mxu0 %v431
    %456 = vmatprep.subr.mxu0 0.0
    %457 = vmatpush1.msra.mxu0 %v430
    %458 = vmatprep.subr.mxu0 0.0
    %459 = vmatpush1.msra.mxu0 %v429
    %460 = vmatprep.subr.mxu0 0.0
    %461 = vmatpush1.msra.mxu0 %v428
    %462 = vmatprep.subr.mxu0 0.0
    %463 = vmatpush1.msra.mxu0 %v427
    %464 = vmatprep.subr.mxu0 0.0
    %465 = vmatpush1.msra.mxu0 %v426
    %466 = vmatprep.subr.mxu0 0.0
    %467 = vmatpush1.msra.mxu0 %v425
    %468 = vmatprep.subr.mxu0 0.0
    %469 = vmatpush1.msra.mxu0 %v424
    %470 = vmatprep.subr.mxu0 0.0
    %471 = vmatpush1.msra.mxu0 %v423
    %472 = vmatprep.subr.mxu0 0.0
    %473 = vmatpush1.msra.mxu0 %v422
    %474 = vmatprep.subr.mxu0 0.0
    %475 = vmatpush1.msra.mxu0 %v421
    %476 = vmatprep.subr.mxu0 0.0
    %477 = vmatpush2.msra.mxu0 0.0
    %478 = vmatprep.subr.mxu0 0.0
    %479 = vmatpush2.msra.mxu0 0.0
    %480 = vmatprep.subr.mxu0 0.0
    %481 = vmatpush2.msra.mxu0 0.0
    %482 = vmatprep.subr.mxu0 0.0
    %483 = vmatpush2.msra.mxu0 0.0
    %484 = vmatprep.subr.mxu0 0.0
    %485 = vmatpush2.msra.mxu0 0.0
    %486 = vmatprep.subr.mxu0 0.0
    %487 = vmatpush2.msra.mxu0 0.0
    %488 = vmatprep.subr.mxu0 0.0
    %489 = vmatpush2.msra.mxu0 0.0
    %490 = vmatprep.subr.mxu0 0.0
    %491 = vmatpush2.msra.mxu0 0.0
    %492 = vmatprep.subr.mxu0 0.0
    %493 = vmatpush2.msra.mxu0 0.0
    %494 = vmatprep.subr.mxu0 0.0
    %495 = vmatpush2.msra.mxu0 0.0
    %496 = vmatprep.subr.mxu0 0.0
    %497 = vmatpush2.msra.mxu0 0.0
    %498 = vmatprep.subr.mxu0 0.0
    %499 = vmatpush2.msra.mxu0 0.0
    %500 = vmatprep.subr.mxu0 0.0
    %501 = vmatpush2.msra.mxu0 0.0
    %502 = vmatprep.subr.mxu0 0.0
    %503 = vmatpush2.msra.mxu0 0.0
    %504 = vmatprep.subr.mxu0 0.0
    %505 = vmatpush2.msra.mxu0 0.0
    %506 = vmatprep.subr.mxu0 0.0
    %507 = vmatpush2.msra.mxu0 0.0
    %508 = vmatprep.mubr.f32.mxu0 0.0
    %509 = vmatmul.mubr.f32.gmra.mxu0 %v418
    %v510 = vpop.f32.mrf.mxu0
    %v511 = vadd.f32 %v442, %v510
    %v512 = vpop.f32.mrf.mxu0
    %513 = vdwg.mxu0
    %v514 = vmax.f32 %v511, 0.0
    %v515 = vld [vmem:[%s9] sm:$0xff]
    %v516 = vld [vmem:[%s9 + $0x8] sm:$0xff]
    %v517 = vld [vmem:[%s9 + $0x10] sm:$0xff]
    %v518 = vld [vmem:[%s9 + $0x18] sm:$0xff]
    %v519 = vld [vmem:[%s9 + $0x20] sm:$0xff]
    %v520 = vld [vmem:[%s9 + $0x28] sm:$0xff]
    %v521 = vld [vmem:[%s9 + $0x30] sm:$0xff]
    %v522 = vld [vmem:[%s9 + $0x38] sm:$0xff]
    %v523 = vld [vmem:[%s9 + $0x40] sm:$0xff]
    %v524 = vld [vmem:[%s9 + $0x48] sm:$0xff]
    %v525 = vld [vmem:[%s9 + $0x50] sm:$0xff]
    %v526 = vld [vmem:[%s9 + $0x58] sm:$0xff]
    %v527 = vld [vmem:[%s9 + $0x60] sm:$0xff]
    %v528 = vld [vmem:[%s9 + $0x68] sm:$0xff]
    %v529 = vld [vmem:[%s9 + $0x70] sm:$0xff]
    %v530 = vld [vmem:[%s9 + $0x78] sm:$0xff]
    %v531 = vld [vmem:[%s10] sm:$0x1]
    %v533 = vlaneseq
    %v534 = vshrl.u32 %v533, 7
    %v535 = vsub.s32 0, %v534
    %v536 = vrot.slane %v531, %v535
    %538 = vmatprep.subr.mxu0 0.0
    %539 = vmatpush1.msra.mxu0 %v530
    %540 = vmatprep.subr.mxu0 0.0
    %541 = vmatpush1.msra.mxu0 %v529
    %542 = vmatprep.subr.mxu0 0.0
    %543 = vmatpush1.msra.mxu0 %v528
    %544 = vmatprep.subr.mxu0 0.0
    %545 = vmatpush1.msra.mxu0 %v527
    %546 = vmatprep.subr.mxu0 0.0
    %547 = vmatpush1.msra.mxu0 %v526
    %548 = vmatprep.subr.mxu0 0.0
    %549 = vmatpush1.msra.mxu0 %v525
    %550 = vmatprep.subr.mxu0 0.0
    %551 = vmatpush1.msra.mxu0 %v524
    %552 = vmatprep.subr.mxu0 0.0
    %553 = vmatpush1.msra.mxu0 %v523
    %554 = vmatprep.subr.mxu0 0.0
    %555 = vmatpush1.msra.mxu0 %v522
    %556 = vmatprep.subr.mxu0 0.0
    %557 = vmatpush1.msra.mxu0 %v521
    %558 = vmatprep.subr.mxu0 0.0
    %559 = vmatpush1.msra.mxu0 %v520
    %560 = vmatprep.subr.mxu0 0.0
    %561 = vmatpush1.msra.mxu0 %v519
    %562 = vmatprep.subr.mxu0 0.0
    %563 = vmatpush1.msra.mxu0 %v518
    %564 = vmatprep.subr.mxu0 0.0
    %565 = vmatpush1.msra.mxu0 %v517
    %566 = vmatprep.subr.mxu0 0.0
    %567 = vmatpush1.msra.mxu0 %v516
    %568 = vmatprep.subr.mxu0 0.0
    %569 = vmatpush1.msra.mxu0 %v515
    %570 = vmatprep.subr.mxu0 0.0
    %571 = vmatpush2.msra.mxu0 0.0
    %572 = vmatprep.subr.mxu0 0.0
    %573 = vmatpush2.msra.mxu0 0.0
    %574 = vmatprep.subr.mxu0 0.0
    %575 = vmatpush2.msra.mxu0 0.0
    %576 = vmatprep.subr.mxu0 0.0
    %577 = vmatpush2.msra.mxu0 0.0
    %578 = vmatprep.subr.mxu0 0.0
    %579 = vmatpush2.msra.mxu0 0.0
    %580 = vmatprep.subr.mxu0 0.0
    %581 = vmatpush2.msra.mxu0 0.0
    %582 = vmatprep.subr.mxu0 0.0
    %583 = vmatpush2.msra.mxu0 0.0
    %584 = vmatprep.subr.mxu0 0.0
    %585 = vmatpush2.msra.mxu0 0.0
    %586 = vmatprep.subr.mxu0 0.0
    %587 = vmatpush2.msra.mxu0 0.0
    %588 = vmatprep.subr.mxu0 0.0
    %589 = vmatpush2.msra.mxu0 0.0
    %590 = vmatprep.subr.mxu0 0.0
    %591 = vmatpush2.msra.mxu0 0.0
    %592 = vmatprep.subr.mxu0 0.0
    %593 = vmatpush2.msra.mxu0 0.0
    %594 = vmatprep.subr.mxu0 0.0
    %595 = vmatpush2.msra.mxu0 0.0
    %596 = vmatprep.subr.mxu0 0.0
    %597 = vmatpush2.msra.mxu0 0.0
    %598 = vmatprep.subr.mxu0 0.0
    %599 = vmatpush2.msra.mxu0 0.0
    %600 = vmatprep.subr.mxu0 0.0
    %601 = vmatpush2.msra.mxu0 0.0
    %602 = vmatprep.mubr.f32.mxu0 0.0
    %603 = vmatmul.mubr.f32.gmra.mxu0 %v514
    %v604 = vpop.f32.mrf.mxu0
    %v605 = vadd.f32 %v536, %v604
    %v606 = vpop.f32.mrf.mxu0
    %607 = vdwg.mxu0
    %608 = vst [vmem:[#allocation2] sm:$0xff] %v605
    %609 = vst [vmem:[#allocation4] sm:$0xff] %v418
    // Predicated region
    $region46: #{encoder_decoder_basis_forward.1} parent=1 // pred_check
      _
    $region47: #{encoder_decoder_basis_forward.1} parent=1 // pred_check_branch
      %611 = sbr.rel (0) target = $region49
    $region48: #{encoder_decoder_basis_forward.1} parent=1 // pred_region
      %s613 = ssub.s32 128, 128
      %614 = vsyncadd [#allocation3], %s613
      %s616 = sshll.u32 [#allocation2], 4
      %s617 = int_to_ptr.vmem [resolvable:$true] %s616
      %619 = dma.vmem_to_hbm [thread:$0]  %s617, 128, %s11, [#allocation3]
    $region49: #{encoder_decoder_basis_forward.1} parent=1 // pred_fallthru
      _
    // Predicated region
    $region50: #{encoder_decoder_basis_forward.1} parent=1 // pred_check
      _
    $region51: #{encoder_decoder_basis_forward.1} parent=1 // pred_check_branch
      %621 = sbr.rel (0) target = $region53
    $region52: #{encoder_decoder_basis_forward.1} parent=1 // pred_region
      %s623 = ssub.s32 128, 128
      %624 = vsyncadd [#allocation5], %s623
      %s626 = sshll.u32 [#allocation4], 4
      %s627 = int_to_ptr.vmem [resolvable:$true] %s626
      %629 = dma.vmem_to_hbm [thread:$0]  %s627, 128, %s12, [#allocation5]
    $region53: #{encoder_decoder_basis_forward.1} parent=1 // pred_fallthru
      _
    // Predicated region
    $region54: #{encoder_decoder_basis_forward.1} parent=1 // pred_check
      _
    $region55: #{encoder_decoder_basis_forward.1} parent=1 // pred_check_branch
      %631 = sbr.rel (0) target = $region57
    $region56: #{encoder_decoder_basis_forward.1} parent=1 // pred_region
      %632 = dma.done [#allocation3], 128
    $region57: #{encoder_decoder_basis_forward.1} parent=1 // pred_fallthru
      _
    // Predicated region
    $region58: #{encoder_decoder_basis_forward.1} parent=1 // pred_check
      _
    $region59: #{encoder_decoder_basis_forward.1} parent=1 // pred_check_branch
      %634 = sbr.rel (0) target = $region61
    $region60: #{encoder_decoder_basis_forward.1} parent=1 // pred_region
      %635 = dma.done [#allocation5], 128
    $region61: #{encoder_decoder_basis_forward.1} parent=1 // pred_fallthru
      _
    %636 = vsyncpa [#allocation3], 1
    %637 = vsyncpa [#allocation5], 1

</llo_original>
